<compile_context>
chip_gen: v6e
topology: v6e:2x2x1
jax: 0.10.0
libtpu: 0.0.40
codegen_flags: <defaults>
</compile_context>

<pallas_src>
import jax
import jax.numpy as jnp
from jax.experimental import pallas as pl
from jax.experimental.pallas import tpu as pltpu


def _encoder_kernel(x_ref, wt_ref, b_ref, o_ref):
    # x_ref:  [TM, din]      f32  (VMEM, tiled over rows)
    # wt_ref: [din, hidden]  bf16 (VMEM, resident across grid)
    # b_ref:  [1, hidden]    f32  (VMEM, resident across grid)
    # o_ref:  [TM, hidden]   out dtype (VMEM)
    x_bf16 = x_ref[...].astype(jnp.bfloat16)          # in-kernel cast (VPU, free slot)
    acc = jnp.dot(x_bf16, wt_ref[...], preferred_element_type=jnp.float32)
    acc = acc + b_ref[...]                            # bias broadcast over rows (f32)
    o_ref[...] = jnp.maximum(acc, 0.0).astype(o_ref.dtype)


def _round_up(x, mult):
    return ((x + mult - 1) // mult) * mult


def prepare_encoder_params(weight, bias):
    """One-time parameter prep (hoisted out of the forward path).

    weight: [hidden, din]  (PyTorch nn.Linear layout)
    bias:   [hidden]
    returns (wt [din, hidden] bf16, bias2d [1, hidden] f32)
    """
    wt = jnp.asarray(weight, jnp.float32).T.astype(jnp.bfloat16)   # [din, hidden]
    b2d = jnp.asarray(bias, jnp.float32).reshape(1, -1)            # [1, hidden]
    return wt, b2d


def encoder_forward(x, wt, bias2d, *, out_dtype=jnp.float32, tile_m=4096):
    """relu(x @ wt + bias), Pallas TPU kernel.

    x:      [..., din]     f32 (cast to bf16 inside the kernel before the MXU)
    wt:     [din, hidden]  bf16 (from prepare_encoder_params)
    bias2d: [1, hidden]    f32
    out_dtype: f32 default (matches PyTorch module); jnp.bfloat16 is the fast
               path (halves the dominant output writeback traffic).
    returns [..., hidden]
    """
    din, hidden = wt.shape
    lead_shape = x.shape[:-1]
    m = 1
    for d in lead_shape:
        m *= d

    x2d = x.reshape(m, din).astype(jnp.float32)

    # Row tile: multiple of 16 (safe for bf16-output sublane packing), capped
    # at tile_m.  For mid/large M, ensure >=2 grid steps so the "parallel"
    # axis can shard across both v7x TensorCores.
    m_pad = _round_up(m, 16)
    tm = min(tile_m, m_pad)
    if m_pad >= 512:
        tm = min(tm, _round_up(pl.cdiv(m_pad, 2), 16))
    grid = (pl.cdiv(m, tm),)

    out_itemsize = jnp.dtype(out_dtype).itemsize
    cost = pl.CostEstimate(
        flops=2 * m * din * hidden,
        transcendentals=0,
        bytes_accessed=(m * din * 4              # x (f32)
                        + din * hidden * 2       # weight (bf16)
                        + hidden * 4             # bias (f32)
                        + m * hidden * out_itemsize),
    )

    out = pl.pallas_call(
        _encoder_kernel,
        out_shape=jax.ShapeDtypeStruct((m, hidden), out_dtype),
        grid=grid,
        in_specs=[
            pl.BlockSpec((tm, din), lambda i: (i, 0)),        # x tiled over M (f32)
            pl.BlockSpec((din, hidden), lambda i: (0, 0)),    # weight resident
            pl.BlockSpec((1, hidden), lambda i: (0, 0)),      # bias resident
        ],
        out_specs=pl.BlockSpec((tm, hidden), lambda i: (i, 0)),
        compiler_params=pltpu.CompilerParams(
            dimension_semantics=("parallel",),
        ),
        cost_estimate=cost,
    )(x2d, wt, bias2d)

    return out.reshape(*lead_shape, hidden)


if __name__ == "__main__":
    din = 32
    hidden_dim = 128

    key = jax.random.PRNGKey(0)
    k_x, k_w, k_b, k_x2 = jax.random.split(key, 4)

    # Deterministic parameter init (PyTorch Linear-style uniform bound).
    bound = 1.0 / (din ** 0.5)
    weight = jax.random.uniform(k_w, (hidden_dim, din), jnp.float32, -bound, bound)
    bias = jax.random.uniform(k_b, (hidden_dim,), jnp.float32, -bound, bound)

    wt, b2d = prepare_encoder_params(weight, bias)

    def ref_fn(xin):
        # Reference with the same in-kernel bf16 quantization, f32 accumulation.
        xb = xin.astype(jnp.bfloat16).astype(jnp.float32)
        wb = wt.astype(jnp.float32)
        return jnp.maximum(xb.reshape(-1, din) @ wb + bias, 0.0).reshape(
            *xin.shape[:-1], hidden_dim)

    # --- Small case matching DGN usage: [batch, n_agents, din] -------------
    batch, n_agents = 2, 8
    x = jax.random.normal(k_x, (batch, n_agents, din), jnp.float32)
    out = jax.block_until_ready(encoder_forward(x, wt, b2d))
    assert out.shape == (batch, n_agents, hidden_dim)
    assert jnp.allclose(out, ref_fn(x), atol=1e-4, rtol=1e-4)
    # Loose check against the full-f32 reference (bf16 matmul quantization).
    ref_f32 = jnp.maximum(jnp.einsum("bnd,hd->bnh", x, weight) + bias, 0.0)
    assert jnp.allclose(out, ref_f32, atol=3e-2, rtol=3e-2)

    # --- Larger case exercising >=2 M tiles including a masked partial tile --
    batch2, n_agents2 = 65, 20            # m = 1300 -> tm = 656 -> tiles 656 + 644
    x2 = jax.random.normal(k_x2, (batch2, n_agents2, din), jnp.float32)
    out2 = jax.block_until_ready(encoder_forward(x2, wt, b2d))
    assert out2.shape == (batch2, n_agents2, hidden_dim)
    assert jnp.allclose(out2, ref_fn(x2), atol=1e-4, rtol=1e-4)

    # --- bf16-output fast path (documented precision trade-off) ------------
    out2_bf16 = jax.block_until_ready(
        encoder_forward(x2, wt, b2d, out_dtype=jnp.bfloat16))
    assert out2_bf16.dtype == jnp.bfloat16
    assert jnp.allclose(out2_bf16.astype(jnp.float32), ref_fn(x2),
                        atol=2e-2, rtol=2e-2)

    print("KERNEL_OK")
</pallas_src>

<mosaic_0001>
module attributes {stable_mosaic.version = 11 : i64} {
  func.func @_encoder_kernel(%arg0: i32, %arg1: memref<16x32xf32, #tpu.memory_space<vmem>>, %arg2: memref<32x128xbf16, #tpu.memory_space<vmem>>, %arg3: memref<1x128xf32, #tpu.memory_space<vmem>>, %arg4: memref<16x128xf32, #tpu.memory_space<vmem>>) attributes {dimension_semantics = [#tpu.dimension_semantics<parallel>], iteration_bounds = array<i64: 1>, scalar_prefetch = 0 : i64, scratch_operands = 0 : i64, tpu.core_type = #tpu.core_type<tc>, window_params = [{transform_indices = @transform_0, window_bounds = array<i64: 16, 32>}, {pipeline_mode = #tpu.pipeline_mode<synchronous>, transform_indices = @transform_1, window_bounds = array<i64: 32, 128>}, {pipeline_mode = #tpu.pipeline_mode<synchronous>, transform_indices = @transform_2, window_bounds = array<i64: 1, 128>}, {transform_indices = @transform_3, window_bounds = array<i64: 16, 128>}]} {
    %c0 = arith.constant 0 : index
    %c0_0 = arith.constant 0 : index
    %0 = vector.load %arg1[%c0, %c0_0] : memref<16x32xf32, #tpu.memory_space<vmem>>, vector<16x32xf32>
    %1 = arith.truncf %0 : vector<16x32xf32> to vector<16x32xbf16>
    %c0_1 = arith.constant 0 : index
    %c0_2 = arith.constant 0 : index
    %2 = vector.load %arg2[%c0_1, %c0_2] : memref<32x128xbf16, #tpu.memory_space<vmem>>, vector<32x128xbf16>
    %cst = arith.constant dense<0.000000e+00> : vector<16x128xf32>
    %3 = tpu.matmul %1, %2, %cst {dimension_numbers = #tpu.dot_dimension_numbers<[1], [0], [0], [1], [0, 0, 1, 1], [], []>} : vector<16x32xbf16>, vector<32x128xbf16>, vector<16x128xf32> -> vector<16x128xf32>
    %c0_3 = arith.constant 0 : index
    %c0_4 = arith.constant 0 : index
    %4 = vector.load %arg3[%c0_3, %c0_4] : memref<1x128xf32, #tpu.memory_space<vmem>>, vector<1x128xf32>
    %5 = vector.broadcast %4 : vector<1x128xf32> to vector<16x128xf32>
    %6 = arith.addf %3, %5 : vector<16x128xf32>
    %cst_5 = arith.constant 0.000000e+00 : f32
    %7 = vector.broadcast %cst_5 : f32 to vector<16x128xf32>
    %8 = arith.maximumf %6, %7 : vector<16x128xf32>
    %c0_6 = arith.constant 0 : index
    %c0_7 = arith.constant 0 : index
    %9 = vector.load %arg4[%c0_6, %c0_7] : memref<16x128xf32, #tpu.memory_space<vmem>>, vector<16x128xf32>
    tpu.vector_store %arg4[%c0_6, %c0_7], %8 {strides = array<i32>} : memref<16x128xf32, #tpu.memory_space<vmem>>, vector<16x128xf32>,
    return
  }
  func.func @transform_0(%arg0: i32) -> (i32, i32) {
    %c0_i32 = arith.constant 0 : i32
    %c0_i32_0 = arith.constant 0 : i32
    return %arg0, %c0_i32 : i32, i32
  }
  func.func @transform_1(%arg0: i32) -> (i32, i32) {
    %c0_i32 = arith.constant 0 : i32
    %c0_i32_0 = arith.constant 0 : i32
    %c0_i32_1 = arith.constant 0 : i32
    return %c0_i32, %c0_i32_0 : i32, i32
  }
  func.func @transform_2(%arg0: i32) -> (i32, i32) {
    %c0_i32 = arith.constant 0 : i32
    %c0_i32_0 = arith.constant 0 : i32
    %c0_i32_1 = arith.constant 0 : i32
    return %c0_i32, %c0_i32_0 : i32, i32
  }
  func.func @transform_3(%arg0: i32) -> (i32, i32) {
    %c0_i32 = arith.constant 0 : i32
    %c0_i32_0 = arith.constant 0 : i32
    return %arg0, %c0_i32 : i32, i32
  }
}

</mosaic_0001>

<llo_original>
// kernel: tpu_custom_call.1
$region0: #{tpu_custom_call.1}
  #allocation0 [shape = 'u32[]', space=smem, size = 0x4, offset = 0x4, fixed_abs, tag = 'smem constant byte address 0x4 - core index']
  #allocation1 [shape = 'u32[144,128]{1,0:T(1,128)}', space=vmem, size = 0x12000, scoped, tag = 'internal scratch']
  %s0 = inlined_call_operand.hbm [shape: f32[16,32], index: 0, kind: input, shape index: {}]
  %s1 = inlined_call_operand.hbm [shape: bf16[32,128], index: 1, kind: input, shape index: {}]
  %s2 = inlined_call_operand.vmem [shape: f32[1,128], index: 2, kind: input, shape index: {}]
  %s3 = inlined_call_operand.hbm [shape: f32[16,128], index: 3, kind: output, shape index: {}]
  %s4 = sld [smem:[#allocation0]]
  $region30: #{tpu_custom_call.1} parent=0
    _
  %s6 = ssub.s32 1, %s4
  %s7 = scalar_select 0, %s6, %s4
  $region1: #{tpu_custom_call.1} parent=0
    #allocation2 [shape = 'u8[8192]{0}', space=vmem, size = 0x2000, scoped, tag = 'input window, operand 0, single buffered']
    #allocation3 [shape = 's32[1]{0}', space=sflag, size = 0x4, scoped, tag = 'scoped memory for tpu_custom_call.1']
    #allocation4 [shape = 's32[1]{0}', space=sflag, size = 0x4, scoped, tag = 'scoped memory for tpu_custom_call.1']
    #allocation5 [shape = 'u8[8192]{0}', space=vmem, size = 0x2000, scoped, tag = 'input window, operand 1, single buffered']
    #allocation6 [shape = 's32[1]{0}', space=sflag, size = 0x4, scoped, tag = 'scoped memory for tpu_custom_call.1']
    #allocation7 [shape = 'u8[8192]{0}', space=vmem, size = 0x2000, scoped, tag = 'output window, operand 0, single buffered']
    %8 = vsyncpa [#allocation3], 0
    %9 = vsyncpa [#allocation6], 0
    %10 = vsyncpa [#allocation4], 0
    // Predicated region
    $region2: #{tpu_custom_call.1} parent=1 // pred_check
      _
    $region3: #{tpu_custom_call.1} parent=1 // pred_check_branch
      %12 = sbr.rel (0) target = $region5
    $region4: #{tpu_custom_call.1} parent=1 // pred_region
      %s14 = ssub.s32 256, 256
      %15 = vsyncadd [#allocation3], %s14
      %s16 = sshll.u32 [#allocation2], 4
      %s17 = int_to_ptr.vmem [resolvable:$true] %s16
      %22 = dma.hbm_to_vmem [thread:$0]  %s0, 256, %s17, [#allocation3], 128, 128, 8
    $region5: #{tpu_custom_call.1} parent=1 // pred_fallthru
      _
    // Predicated region
    $region6: #{tpu_custom_call.1} parent=1 // pred_check
      _
    $region7: #{tpu_custom_call.1} parent=1 // pred_check_branch
      %24 = sbr.rel (0) target = $region9
    $region8: #{tpu_custom_call.1} parent=1 // pred_region
      %s26 = ssub.s32 256, 256
      %27 = vsyncadd [#allocation6], %s26
      %s28 = sshll.u32 [#allocation5], 4
      %s29 = int_to_ptr.vmem [resolvable:$true] %s28
      %34 = dma.hbm_to_vmem [thread:$0]  %s1, 256, %s29, [#allocation6], 64, 64, 4
    $region9: #{tpu_custom_call.1} parent=1 // pred_fallthru
      _
    // Predicated region
    $region10: #{tpu_custom_call.1} parent=1 // pred_check
      _
    $region11: #{tpu_custom_call.1} parent=1 // pred_check_branch
      %36 = sbr.rel (0) target = $region13
    $region12: #{tpu_custom_call.1} parent=1 // pred_region
      _
    $region13: #{tpu_custom_call.1} parent=1 // pred_fallthru
      _
    // Predicated region
    $region14: #{tpu_custom_call.1} parent=1 // pred_check
      _
    $region15: #{tpu_custom_call.1} parent=1 // pred_check_branch
      %38 = sbr.rel (0) target = $region17
    $region16: #{tpu_custom_call.1} parent=1 // pred_region
      %39 = dma.done [#allocation3], 256
    $region17: #{tpu_custom_call.1} parent=1 // pred_fallthru
      _
    // Predicated region
    $region18: #{tpu_custom_call.1} parent=1 // pred_check
      _
    $region19: #{tpu_custom_call.1} parent=1 // pred_check_branch
      %41 = sbr.rel (0) target = $region21
    $region20: #{tpu_custom_call.1} parent=1 // pred_region
      %42 = dma.done [#allocation6], 256
    $region21: #{tpu_custom_call.1} parent=1 // pred_fallthru
      _
    %v44 = vld [vmem:[#allocation2] sm:$0xff]
    %v45 = vld [vmem:[#allocation2 + $0x8] sm:$0xff]
    %v46 = vpack.c.bf16 %v45, %v44
    %v47 = vld [vmem:[#allocation5] sm:$0xf]
    %v48 = vld [vmem:[#allocation5 + $0x4] sm:$0xf]
    %v49 = vld [vmem:[#allocation5 + $0x8] sm:$0xf]
    %v50 = vld [vmem:[#allocation5 + $0xc] sm:$0xf]
    %v51 = vld [vmem:[%s2] sm:$0x1]
    %v53 = vlaneseq
    %v54 = vshrl.u32 %v53, 7
    %v55 = vsub.s32 0, %v54
    %v56 = vrot.slane %v51, %v55
    %v62 = vunpack.c.l.b16 %v47
    %v63 = vunpack.c.l.b16 %v48
    %v64 = vunpack.c.l.b16 %v49
    %v65 = vunpack.c.l.b16 %v50
    %v66 = vpack.c.b16 %v63, %v62
    %v67 = vpack.c.b16 %v65, %v64
    %vm70 = vcmask 261120
    %v72 = vsel %vm70, %v46, 0
    %74 = vmatprep.subr.bf16.mxu0 0
    %75 = vmatpush1.bf16.msra.mxu0 0
    %76 = vmatprep.subr.bf16.mxu0 0
    %77 = vmatpush1.bf16.msra.mxu0 0
    %78 = vmatprep.subr.bf16.mxu0 0
    %79 = vmatpush1.bf16.msra.mxu0 0
    %80 = vmatprep.subr.bf16.mxu0 0
    %81 = vmatpush1.bf16.msra.mxu0 0
    %82 = vmatprep.subr.bf16.mxu0 0
    %83 = vmatpush1.bf16.msra.mxu0 0
    %84 = vmatprep.subr.bf16.mxu0 0
    %85 = vmatpush1.bf16.msra.mxu0 0
    %86 = vmatprep.subr.bf16.mxu0 0
    %87 = vmatpush1.bf16.msra.mxu0 %v67
    %88 = vmatprep.subr.bf16.mxu0 0
    %89 = vmatpush1.bf16.msra.mxu0 %v66
    %90 = vmatprep.subr.bf16.mxu0 0
    %91 = vmatpush2.bf16.msra.mxu0 0
    %92 = vmatprep.subr.bf16.mxu0 0
    %93 = vmatpush2.bf16.msra.mxu0 0
    %94 = vmatprep.subr.bf16.mxu0 0
    %95 = vmatpush2.bf16.msra.mxu0 0
    %96 = vmatprep.subr.bf16.mxu0 0
    %97 = vmatpush2.bf16.msra.mxu0 0
    %98 = vmatprep.subr.bf16.mxu0 0
    %99 = vmatpush2.bf16.msra.mxu0 0
    %100 = vmatprep.subr.bf16.mxu0 0
    %101 = vmatpush2.bf16.msra.mxu0 0
    %102 = vmatprep.subr.bf16.mxu0 0
    %103 = vmatpush2.bf16.msra.mxu0 0
    %104 = vmatprep.subr.bf16.mxu0 0
    %105 = vmatpush2.bf16.msra.mxu0 0
    %106 = vmatprep.mubr.bf16.mxu0 0
    %107 = vmatmul.mubr.bf16.gmra.mxu0 %v72
    %v108 = vpop.f32.mrf.mxu0
    %v109 = vadd.f32 %v56, %v108
    %v110 = vpop.f32.mrf.mxu0
    %v111 = vpop.f32.mrf.mxu0
    %v112 = vadd.f32 %v56, %v111
    %v113 = vpop.f32.mrf.mxu0
    %114 = vdwg.mxu0
    %v115 = vmax.f32 %v109, 0.0
    %v116 = vmax.f32 %v112, 0.0
    %117 = vst [vmem:[#allocation7] sm:$0xff] %v115
    %118 = vst [vmem:[#allocation7 + $0x8] sm:$0xff] %v116
    // Predicated region
    $region22: #{tpu_custom_call.1} parent=1 // pred_check
      _
    $region23: #{tpu_custom_call.1} parent=1 // pred_check_branch
      %120 = sbr.rel (0) target = $region25
    $region24: #{tpu_custom_call.1} parent=1 // pred_region
      %s122 = ssub.s32 256, 256
      %123 = vsyncadd [#allocation4], %s122
      %s124 = sshll.u32 [#allocation7], 4
      %s125 = int_to_ptr.vmem [resolvable:$true] %s124
      %130 = dma.vmem_to_hbm [thread:$0]  %s125, 256, %s3, [#allocation4], 128, 128, 8
    $region25: #{tpu_custom_call.1} parent=1 // pred_fallthru
      _
    // Predicated region
    $region26: #{tpu_custom_call.1} parent=1 // pred_check
      _
    $region27: #{tpu_custom_call.1} parent=1 // pred_check_branch
      %132 = sbr.rel (0) target = $region29
    $region28: #{tpu_custom_call.1} parent=1 // pred_region
      %133 = dma.done [#allocation4], 256
    $region29: #{tpu_custom_call.1} parent=1 // pred_fallthru
      _
    %134 = vsyncpa [#allocation3], 1
    %135 = vsyncpa [#allocation6], 1
    %136 = vsyncpa [#allocation4], 1

</llo_original>
